<compile_context>
chip_gen: v7x
topology: tpu7x:2x2x1
jax: 0.10.0
libtpu: 0.0.40
codegen_flags: <defaults>
</compile_context>

<pallas_src>
import jax
import jax.numpy as jnp
from jax.experimental import pallas as pl
from jax.experimental.pallas import tpu as pltpu


def no_pos_encoding(x: jax.Array) -> jax.Array:
    """NoPosEncoding.forward(x) == x.  Identity: no kernel, no copy."""
    return x


def _copy_kernel(x_ref, o_ref):
    # Pure pass-through of the current VMEM tile.
    o_ref[...] = x_ref[...]


def no_pos_encoding_copy(x: jax.Array) -> jax.Array:
    """Materialized identity (explicit HBM->HBM copy) as a Pallas kernel.

    Only for when a fresh output buffer is genuinely required; otherwise use
    `no_pos_encoding`, which is free.
    """
    orig_shape = x.shape
    total = x.size
    itemsize = jnp.dtype(x.dtype).itemsize

    LANE = 128
    if total % LANE == 0:
        # Lane-dense 2D view: widest 128*k (k <= 32) that divides the element count.
        width = LANE
        for k in (32, 16, 8, 4, 2, 1):
            if total % (LANE * k) == 0:
                width = LANE * k
                break
        rows = total // width
        x2 = x.reshape(rows, width)

        if rows <= 8:
            # Block equal to full array extent is always legal.
            block_rows = rows
        else:
            # Target ~2 MiB per block, multiple of 8 sublanes.
            target_rows = max(8, (2 * 1024 * 1024) // (width * itemsize))
            target_rows -= target_rows % 8
            rows_aligned = rows - rows % 8 if rows % 8 else rows
            block_rows = max(8, min(rows_aligned, target_rows))
        block_shape = (block_rows, width)
        grid = (pl.cdiv(rows, block_rows),)
    else:
        # TODO(synk): element count not a multiple of 128; fall back to a single
        # full-array 2D block (fine for the small shapes this module sees).
        lead = 1
        for d in orig_shape[:-1]:
            lead *= d
        x2 = x.reshape(lead, orig_shape[-1])
        block_shape = x2.shape
        grid = (1,)

    out2 = pl.pallas_call(
        _copy_kernel,
        out_shape=jax.ShapeDtypeStruct(x2.shape, x2.dtype),
        grid=grid,
        in_specs=[pl.BlockSpec(block_shape, lambda i: (i, 0))],
        out_specs=pl.BlockSpec(block_shape, lambda i: (i, 0)),
        compiler_params=pltpu.CompilerParams(
            dimension_semantics=("parallel",),
        ),
        cost_estimate=pl.CostEstimate(
            flops=0, transcendentals=0, bytes_accessed=2 * total * itemsize),
    )(x2)
    return out2.reshape(orig_shape)


if __name__ == "__main__":
    # NoPosEncoding.__init__ has no parameters; only the input matters.
    key = jax.random.PRNGKey(0)
    B, S, D = 2, 8, 32  # small transformer-style token tensor (batch, seq, hidden)
    x = jax.random.normal(key, (B, S, D), dtype=jnp.float32)

    # Preferred path: pure identity (what the module actually does).
    y = no_pos_encoding(x)
    jax.block_until_ready(y)
    assert y.shape == x.shape and y.dtype == x.dtype
    assert bool(jnp.array_equal(y, x))

    # Explicit Pallas copy path (lane-dense tiled HBM copy).
    y_copy = no_pos_encoding_copy(x)
    jax.block_until_ready(y_copy)
    assert y_copy.shape == x.shape and y_copy.dtype == x.dtype
    assert bool(jnp.array_equal(y_copy, x))

    print("KERNEL_OK")
</pallas_src>

<mosaic_0001>
module attributes {stable_mosaic.version = 11 : i64} {
  func.func @_copy_kernel(%arg0: i32, %arg1: memref<1x512xf32, #tpu.memory_space<vmem>>, %arg2: memref<1x512xf32, #tpu.memory_space<vmem>>) attributes {dimension_semantics = [#tpu.dimension_semantics<parallel>], iteration_bounds = array<i64: 1>, scalar_prefetch = 0 : i64, scratch_operands = 0 : i64, tpu.core_type = #tpu.core_type<tc>, window_params = [{transform_indices = @transform_0, window_bounds = array<i64: 1, 512>}, {transform_indices = @transform_1, window_bounds = array<i64: 1, 512>}]} {
    %c0 = arith.constant 0 : index
    %c0_0 = arith.constant 0 : index
    %0 = vector.load %arg1[%c0, %c0_0] : memref<1x512xf32, #tpu.memory_space<vmem>>, vector<1x512xf32>
    %c0_1 = arith.constant 0 : index
    %c0_2 = arith.constant 0 : index
    %1 = vector.load %arg2[%c0_1, %c0_2] : memref<1x512xf32, #tpu.memory_space<vmem>>, vector<1x512xf32>
    tpu.vector_store %arg2[%c0_1, %c0_2], %0 {strides = array<i32>} : memref<1x512xf32, #tpu.memory_space<vmem>>, vector<1x512xf32>,
    return
  }
  func.func @transform_0(%arg0: i32) -> (i32, i32) {
    %c0_i32 = arith.constant 0 : i32
    %c0_i32_0 = arith.constant 0 : i32
    return %arg0, %c0_i32 : i32, i32
  }
  func.func @transform_1(%arg0: i32) -> (i32, i32) {
    %c0_i32 = arith.constant 0 : i32
    %c0_i32_0 = arith.constant 0 : i32
    return %arg0, %c0_i32 : i32, i32
  }
}

</mosaic_0001>

<llo_original>
// kernel: tpu_custom_call.1
$region0: #{tpu_custom_call.1}
  #allocation0 [shape = 'u32[]', space=smem, size = 0x4, offset = 0x4, fixed_abs, tag = 'smem constant byte address 0x4 - core index']
  #allocation1 [shape = 'u32[144,128]{1,0:T(1,128)}', space=vmem, size = 0x12000, scoped, tag = 'internal scratch']
  %s0 = inlined_call_operand.hbm [shape: f32[1,512], index: 0, kind: input, shape index: {}]
  %s1 = inlined_call_operand.hbm [shape: f32[1,512], index: 1, kind: output, shape index: {}]
  %s2 = sld [smem:[#allocation0]]
  $region18: #{tpu_custom_call.1} parent=0
    _
  %s4 = ssub.s32 1, %s2
  %s5 = scalar_select 0, %s4, %s2
  $region1: #{tpu_custom_call.1} parent=0
    #allocation2 [shape = 'u8[2048]{0}', space=vmem, size = 0x800, scoped, tag = 'input window, operand 0, single buffered']
    #allocation3 [shape = 's32[1]{0}', space=sflag, size = 0x4, scoped, tag = 'scoped memory for tpu_custom_call.1']
    #allocation4 [shape = 's32[1]{0}', space=sflag, size = 0x4, scoped, tag = 'scoped memory for tpu_custom_call.1']
    #allocation5 [shape = 'u8[2048]{0}', space=vmem, size = 0x800, scoped, tag = 'output window, operand 0, single buffered']
    %6 = vsyncpa [#allocation3], 0
    %7 = vsyncpa [#allocation4], 0
    // Predicated region
    $region2: #{tpu_custom_call.1} parent=1 // pred_check
      _
    $region3: #{tpu_custom_call.1} parent=1 // pred_check_branch
      %9 = sbr.rel (0) target = $region5
    $region4: #{tpu_custom_call.1} parent=1 // pred_region
      %s11 = ssub.s32 64, 64
      %12 = vsyncadd [#allocation3], %s11
      %s14 = sshll.u32 [#allocation2], 4
      %s15 = int_to_ptr.vmem [resolvable:$true] %s14
      %17 = dma.hbm_to_vmem [thread:$0]  %s0, 64, %s15, [#allocation3]
    $region5: #{tpu_custom_call.1} parent=1 // pred_fallthru
      _
    // Predicated region
    $region6: #{tpu_custom_call.1} parent=1 // pred_check
      _
    $region7: #{tpu_custom_call.1} parent=1 // pred_check_branch
      %19 = sbr.rel (0) target = $region9
    $region8: #{tpu_custom_call.1} parent=1 // pred_region
      %20 = dma.done [#allocation3], 64
    $region9: #{tpu_custom_call.1} parent=1 // pred_fallthru
      _
    %v21 = vld [vmem:[#allocation2] sm:$0xf]
    %v22 = vlaneseq
    %vm23 = vcmp.ge.s32.totalorder %v22, 0
    %vm24 = vcmp.lt.s32.totalorder %v22, 512
    %vm25 = vmand %vm23, %vm24
    %26 = vst.msk [vmem:[#allocation5] sm:$0xf] %vm25, %v21
    // Predicated region
    $region10: #{tpu_custom_call.1} parent=1 // pred_check
      _
    $region11: #{tpu_custom_call.1} parent=1 // pred_check_branch
      %28 = sbr.rel (0) target = $region13
    $region12: #{tpu_custom_call.1} parent=1 // pred_region
      %s30 = ssub.s32 64, 64
      %31 = vsyncadd [#allocation4], %s30
      %s33 = sshll.u32 [#allocation5], 4
      %s34 = int_to_ptr.vmem [resolvable:$true] %s33
      %36 = dma.vmem_to_hbm [thread:$0]  %s34, 64, %s1, [#allocation4]
    $region13: #{tpu_custom_call.1} parent=1 // pred_fallthru
      _
    // Predicated region
    $region14: #{tpu_custom_call.1} parent=1 // pred_check
      _
    $region15: #{tpu_custom_call.1} parent=1 // pred_check_branch
      %38 = sbr.rel (0) target = $region17
    $region16: #{tpu_custom_call.1} parent=1 // pred_region
      %39 = dma.done [#allocation4], 64
    $region17: #{tpu_custom_call.1} parent=1 // pred_fallthru
      _
    %40 = vsyncpa [#allocation3], 1
    %41 = vsyncpa [#allocation4], 1

</llo_original>
